<compile_context>
chip_gen: v6e
topology: v6e:2x2x1
jax: 0.10.0
libtpu: 0.0.40
codegen_flags: <defaults>
</compile_context>

<pallas_src>
import jax
import jax.numpy as jnp
from jax import lax
from jax.experimental import pallas as pl
from jax.experimental.pallas import tpu as pltpu

HIDDEN = 32
EMBED = 16
VOCAB = 32
PAD_IDX = 0


def _vmem():
    # whole-array block resident in VMEM (total working set is << 1 MiB)
    return pl.BlockSpec(memory_space=pltpu.MemorySpace.VMEM)


def _lstm_gates(gates, c, H):
    """gates:(B,4H) c:(B,H) -> (h_new, c_new), PyTorch [i,f,g,o] order."""
    i = jax.nn.sigmoid(gates[:, 0:H])
    f = jax.nn.sigmoid(gates[:, H:2 * H])
    g = jnp.tanh(gates[:, 2 * H:3 * H])
    o = jax.nn.sigmoid(gates[:, 3 * H:4 * H])
    c_new = f * c + i * g
    h_new = o * jnp.tanh(c_new)
    return h_new, c_new


# ----------------------------------------------------------------------------
# Single fused kernel: encoder LSTM + (attention + decoder LSTM + fc) loop
# ----------------------------------------------------------------------------

def seq2seq_kernel(src_emb_ref, dec_emb_ref,
                   enc_w_ih_ref, enc_w_hh_ref, enc_b_ref,
                   dec_w_emb_ref, dec_w_ctx_ref, dec_w_hh_ref, dec_b_ref,
                   att_w1_ref, att_w2_ref, att_v_ref,
                   fc_w_ref, fc_b_ref,
                   logits_ref,
                   h_sc, c_sc, enc_sc, w2e_sc):
    S = src_emb_ref.shape[0]
    Tm1 = dec_emb_ref.shape[0]
    B, H = h_sc.shape

    # Load weights / broadcasts once; they stay loop-invariant values.
    enc_w_ih = enc_w_ih_ref[...]
    enc_w_hh = enc_w_hh_ref[...]
    enc_b = enc_b_ref[...]
    dec_w_emb = dec_w_emb_ref[...]
    dec_w_ctx = dec_w_ctx_ref[...]
    dec_w_hh = dec_w_hh_ref[...]
    dec_b = dec_b_ref[...]
    att_w1 = att_w1_ref[...]
    att_w2 = att_w2_ref[...]
    v_b = att_v_ref[...][None, :, :]        # (1, 1, H)
    fc_w = fc_w_ref[...]
    fc_b = fc_b_ref[...]

    h_sc[...] = jnp.zeros_like(h_sc)
    c_sc[...] = jnp.zeros_like(c_sc)

    # ---------------- Encoder: all S LSTM steps fused ----------------
    def enc_step(t, carry):
        x = src_emb_ref[t]                                  # (B, E)
        h = h_sc[...]
        c = c_sc[...]
        gates = (jnp.dot(x, enc_w_ih, preferred_element_type=jnp.float32)
                 + jnp.dot(h, enc_w_hh, preferred_element_type=jnp.float32)
                 + enc_b)                                   # (B, 4H)
        h_new, c_new = _lstm_gates(gates, c, H)
        h_sc[...] = h_new
        c_sc[...] = c_new
        enc_sc[t] = h_new                                   # encoder output
        # Step-invariant attention term W2 @ enc_out — hoisted out of decoder.
        w2e_sc[t] = jnp.dot(h_new, att_w2, preferred_element_type=jnp.float32)
        return carry

    lax.fori_loop(0, S, enc_step, 0)

    enc_all = enc_sc[...]                                   # (S, B, H)
    w2e = w2e_sc[...]                                       # (S, B, H)

    # --------- Decoder: attention + LSTM + projection, all T-1 steps ---------
    def dec_step(t, carry):
        emb = dec_emb_ref[t]                                # (B, E)
        h = h_sc[...]
        c = c_sc[...]

        # Bahdanau attention: softmax_s( v . tanh(W1 h + W2 enc_s) )
        w1h = jnp.dot(h, att_w1, preferred_element_type=jnp.float32)   # (B, H)
        energy = jnp.tanh(w1h[None, :, :] + w2e)                       # (S, B, H)
        scores = jnp.sum(energy * v_b, axis=-1, keepdims=True)         # (S, B, 1)
        m = jnp.max(scores, axis=0, keepdims=True)                     # (1, B, 1)
        e = jnp.exp(scores - m)
        denom = jnp.sum(e, axis=0, keepdims=True)                      # (1, B, 1)
        attn = e * pl.reciprocal(denom, approx=True)                   # (S, B, 1)
        ctx = jnp.sum(attn * enc_all, axis=0)                          # (B, H)

        # Decoder LSTM cell; input = [embedded, context] (dots accumulate on MXU,
        # so no in-kernel lane-concat is needed).
        gates = (jnp.dot(emb, dec_w_emb, preferred_element_type=jnp.float32)
                 + jnp.dot(ctx, dec_w_ctx, preferred_element_type=jnp.float32)
                 + jnp.dot(h, dec_w_hh, preferred_element_type=jnp.float32)
                 + dec_b)                                   # (B, 4H)
        h_new, c_new = _lstm_gates(gates, c, H)
        h_sc[...] = h_new
        c_sc[...] = c_new

        # Output projection, written straight into the resident output block.
        logits_ref[t] = (jnp.dot(h_new, fc_w, preferred_element_type=jnp.float32)
                         + fc_b)                            # (B, V)
        return carry

    lax.fori_loop(0, Tm1, dec_step, 0)


def seq2seq_pallas(params, src_emb_t, dec_emb_t):
    S, B, _E = src_emb_t.shape
    Tm1 = dec_emb_t.shape[0]
    H, V = HIDDEN, VOCAB
    return pl.pallas_call(
        seq2seq_kernel,
        out_shape=jax.ShapeDtypeStruct((Tm1, B, V), jnp.float32),
        in_specs=[_vmem()] * 14,
        out_specs=_vmem(),
        scratch_shapes=[
            pltpu.VMEM((B, H), jnp.float32),      # h
            pltpu.VMEM((B, H), jnp.float32),      # c
            pltpu.VMEM((S, B, H), jnp.float32),   # encoder outputs
            pltpu.VMEM((S, B, H), jnp.float32),   # W2 @ encoder outputs
        ],
    )(src_emb_t, dec_emb_t,
      params['enc_w_ih'], params['enc_w_hh'], params['enc_b'],
      params['dec_w_emb'], params['dec_w_ctx'], params['dec_w_hh'], params['dec_b'],
      params['att_w1'], params['att_w2'], params['att_v'],
      params['fc_w'], params['fc_b'])


# ----------------------------------------------------------------------------
# Parameter init (deterministic, synthetic) + jitted forward
# ----------------------------------------------------------------------------

def init_params(key):
    ks = jax.random.split(key, 14)

    def w(k, shape, scale=0.1):
        return jax.random.normal(k, shape, jnp.float32) * scale

    return {
        # encoder
        'enc_emb':   w(ks[0], (VOCAB, EMBED)).at[PAD_IDX].set(0.0),
        'enc_w_ih':  w(ks[1], (EMBED, 4 * HIDDEN)),
        'enc_w_hh':  w(ks[2], (HIDDEN, 4 * HIDDEN)),
        'enc_b':     w(ks[3], (1, 4 * HIDDEN)),          # b_ih + b_hh combined
        # decoder (input weight split into [embedded | context] halves)
        'dec_emb':   w(ks[4], (VOCAB, EMBED)).at[PAD_IDX].set(0.0),
        'dec_w_emb': w(ks[5], (EMBED, 4 * HIDDEN)),
        'dec_w_ctx': w(ks[6], (HIDDEN, 4 * HIDDEN)),
        'dec_w_hh':  w(ks[7], (HIDDEN, 4 * HIDDEN)),
        'dec_b':     w(ks[8], (1, 4 * HIDDEN)),
        # attention
        'att_w1':    w(ks[9], (HIDDEN, HIDDEN)),
        'att_w2':    w(ks[10], (HIDDEN, HIDDEN)),
        'att_v':     w(ks[11], (1, HIDDEN)),
        # output projection
        'fc_w':      w(ks[12], (HIDDEN, VOCAB)),
        'fc_b':      jnp.zeros((1, VOCAB), jnp.float32),
    }


@jax.jit
def seq2seq_forward(params, src, tgt):
    # TODO(synk): embedding gathers (nn.Embedding) stay in XLA as jnp.take;
    # a Pallas DMA-gather is not warranted at these sizes.
    src_emb = jnp.take(params['enc_emb'], src, axis=0)            # (B, S, E)
    dec_emb = jnp.take(params['dec_emb'], tgt[:, :-1], axis=0)    # (B, T-1, E) teacher forcing
    src_emb_t = jnp.transpose(src_emb, (1, 0, 2))                 # (S, B, E)
    dec_emb_t = jnp.transpose(dec_emb, (1, 0, 2))                 # (T-1, B, E)
    logits_t = seq2seq_pallas(params, src_emb_t, dec_emb_t)       # (T-1, B, V)
    return jnp.transpose(logits_t, (1, 0, 2))                     # (B, T-1, V)


if __name__ == "__main__":
    key = jax.random.PRNGKey(0)
    pkey, skey, tkey = jax.random.split(key, 3)
    params = init_params(pkey)

    B, SRC_LEN, TGT_LEN = 2, 8, 6
    src = jax.random.randint(skey, (B, SRC_LEN), 0, VOCAB, dtype=jnp.int32)
    tgt = jax.random.randint(tkey, (B, TGT_LEN), 0, VOCAB, dtype=jnp.int32)

    out = seq2seq_forward(params, src, tgt)
    out = jax.block_until_ready(out)
    assert out.shape == (B, TGT_LEN - 1, VOCAB), out.shape
    assert bool(jnp.all(jnp.isfinite(out)))
    print("KERNEL_OK")
</pallas_src>

<mosaic_0001>
module attributes {stable_mosaic.version = 11 : i64} {
  func.func @seq2seq_kernel(%arg0: memref<8x2x16xf32, #tpu.memory_space<vmem>>, %arg1: memref<5x2x16xf32, #tpu.memory_space<vmem>>, %arg2: memref<16x128xf32, #tpu.memory_space<vmem>>, %arg3: memref<32x128xf32, #tpu.memory_space<vmem>>, %arg4: memref<1x128xf32, #tpu.memory_space<vmem>>, %arg5: memref<16x128xf32, #tpu.memory_space<vmem>>, %arg6: memref<32x128xf32, #tpu.memory_space<vmem>>, %arg7: memref<32x128xf32, #tpu.memory_space<vmem>>, %arg8: memref<1x128xf32, #tpu.memory_space<vmem>>, %arg9: memref<32x32xf32, #tpu.memory_space<vmem>>, %arg10: memref<32x32xf32, #tpu.memory_space<vmem>>, %arg11: memref<1x32xf32, #tpu.memory_space<vmem>>, %arg12: memref<32x32xf32, #tpu.memory_space<vmem>>, %arg13: memref<1x32xf32, #tpu.memory_space<vmem>>, %arg14: memref<5x2x32xf32, #tpu.memory_space<vmem>>, %arg15: memref<2x32xf32, #tpu.memory_space<vmem>>, %arg16: memref<2x32xf32, #tpu.memory_space<vmem>>, %arg17: memref<8x2x32xf32, #tpu.memory_space<vmem>>, %arg18: memref<8x2x32xf32, #tpu.memory_space<vmem>>) attributes {dimension_semantics = [], scalar_prefetch = 0 : i64, scratch_operands = 4 : i64, tpu.core_type = #tpu.core_type<tc>} {
    %c0 = arith.constant 0 : index
    %c0_0 = arith.constant 0 : index
    %0 = vector.load %arg2[%c0, %c0_0] : memref<16x128xf32, #tpu.memory_space<vmem>>, vector<16x128xf32>
    %c0_1 = arith.constant 0 : index
    %c0_2 = arith.constant 0 : index
    %1 = vector.load %arg3[%c0_1, %c0_2] : memref<32x128xf32, #tpu.memory_space<vmem>>, vector<32x128xf32>
    %c0_3 = arith.constant 0 : index
    %c0_4 = arith.constant 0 : index
    %2 = vector.load %arg4[%c0_3, %c0_4] : memref<1x128xf32, #tpu.memory_space<vmem>>, vector<1x128xf32>
    %c0_5 = arith.constant 0 : index
    %c0_6 = arith.constant 0 : index
    %3 = vector.load %arg5[%c0_5, %c0_6] : memref<16x128xf32, #tpu.memory_space<vmem>>, vector<16x128xf32>
    %c0_7 = arith.constant 0 : index
    %c0_8 = arith.constant 0 : index
    %4 = vector.load %arg6[%c0_7, %c0_8] : memref<32x128xf32, #tpu.memory_space<vmem>>, vector<32x128xf32>
    %c0_9 = arith.constant 0 : index
    %c0_10 = arith.constant 0 : index
    %5 = vector.load %arg7[%c0_9, %c0_10] : memref<32x128xf32, #tpu.memory_space<vmem>>, vector<32x128xf32>
    %c0_11 = arith.constant 0 : index
    %c0_12 = arith.constant 0 : index
    %6 = vector.load %arg8[%c0_11, %c0_12] : memref<1x128xf32, #tpu.memory_space<vmem>>, vector<1x128xf32>
    %c0_13 = arith.constant 0 : index
    %c0_14 = arith.constant 0 : index
    %7 = vector.load %arg9[%c0_13, %c0_14] : memref<32x32xf32, #tpu.memory_space<vmem>>, vector<32x32xf32>
    %c0_15 = arith.constant 0 : index
    %c0_16 = arith.constant 0 : index
    %8 = vector.load %arg10[%c0_15, %c0_16] : memref<32x32xf32, #tpu.memory_space<vmem>>, vector<32x32xf32>
    %c0_17 = arith.constant 0 : index
    %c0_18 = arith.constant 0 : index
    %9 = vector.load %arg11[%c0_17, %c0_18] : memref<1x32xf32, #tpu.memory_space<vmem>>, vector<1x32xf32>
    %10 = vector.shape_cast %9 : vector<1x32xf32> to vector<1x1x32xf32>
    %c0_19 = arith.constant 0 : index
    %c0_20 = arith.constant 0 : index
    %11 = vector.load %arg12[%c0_19, %c0_20] : memref<32x32xf32, #tpu.memory_space<vmem>>, vector<32x32xf32>
    %c0_21 = arith.constant 0 : index
    %c0_22 = arith.constant 0 : index
    %12 = vector.load %arg13[%c0_21, %c0_22] : memref<1x32xf32, #tpu.memory_space<vmem>>, vector<1x32xf32>
    %cst = arith.constant 0.000000e+00 : f32
    %13 = vector.broadcast %cst : f32 to vector<2x32xf32>
    %c0_23 = arith.constant 0 : index
    %c0_24 = arith.constant 0 : index
    %14 = vector.load %arg15[%c0_23, %c0_24] : memref<2x32xf32, #tpu.memory_space<vmem>>, vector<2x32xf32>
    tpu.vector_store %arg15[%c0_23, %c0_24], %13 {strides = array<i32>} : memref<2x32xf32, #tpu.memory_space<vmem>>, vector<2x32xf32>,
    %cst_25 = arith.constant 0.000000e+00 : f32
    %15 = vector.broadcast %cst_25 : f32 to vector<2x32xf32>
    %c0_26 = arith.constant 0 : index
    %c0_27 = arith.constant 0 : index
    %16 = vector.load %arg16[%c0_26, %c0_27] : memref<2x32xf32, #tpu.memory_space<vmem>>, vector<2x32xf32>
    tpu.vector_store %arg16[%c0_26, %c0_27], %15 {strides = array<i32>} : memref<2x32xf32, #tpu.memory_space<vmem>>, vector<2x32xf32>,
    %c0_i32 = arith.constant 0 : i32
    %c8_i32 = arith.constant 8 : i32
    %17 = arith.addi %c0_i32, %c8_i32 : i32
    %c1_i32 = arith.constant 1 : i32
    scf.for %arg19 = %c0_i32 to %17 step %c1_i32  : i32 {
      %21 = arith.index_cast %arg19 : i32 to index
      %c0_38 = arith.constant 0 : index
      %c0_39 = arith.constant 0 : index
      %22 = vector.load %arg0[%21, %c0_38, %c0_39] : memref<8x2x16xf32, #tpu.memory_space<vmem>>, vector<1x2x16xf32>
      %23 = vector.shape_cast %22 : vector<1x2x16xf32> to vector<2x16xf32>
      %c0_40 = arith.constant 0 : index
      %c0_41 = arith.constant 0 : index
      %24 = vector.load %arg15[%c0_40, %c0_41] : memref<2x32xf32, #tpu.memory_space<vmem>>, vector<2x32xf32>
      %c0_42 = arith.constant 0 : index
      %c0_43 = arith.constant 0 : index
      %25 = vector.load %arg16[%c0_42, %c0_43] : memref<2x32xf32, #tpu.memory_space<vmem>>, vector<2x32xf32>
      %cst_44 = arith.constant dense<0.000000e+00> : vector<2x128xf32>
      %26 = tpu.matmul %23, %0, %cst_44 {dimension_numbers = #tpu.dot_dimension_numbers<[1], [0], [0], [1], [0, 0, 1, 1], [], []>} : vector<2x16xf32>, vector<16x128xf32>, vector<2x128xf32> -> vector<2x128xf32>
      %cst_45 = arith.constant dense<0.000000e+00> : vector<2x128xf32>
      %27 = tpu.matmul %24, %1, %cst_45 {dimension_numbers = #tpu.dot_dimension_numbers<[1], [0], [0], [1], [0, 0, 1, 1], [], []>} : vector<2x32xf32>, vector<32x128xf32>, vector<2x128xf32> -> vector<2x128xf32>
      %28 = arith.addf %26, %27 : vector<2x128xf32>
      %29 = vector.broadcast %2 : vector<1x128xf32> to vector<2x128xf32>
      %30 = arith.addf %28, %29 : vector<2x128xf32>
      %31 = vector.extract_strided_slice %30 {offsets = [0, 0], sizes = [2, 32], strides = [1, 1]} : vector<2x128xf32> to vector<2x32xf32>
      %32 = arith.negf %31 : vector<2x32xf32>
      %33 = math.exp %32 : vector<2x32xf32>
      %cst_46 = arith.constant 1.000000e+00 : f32
      %34 = vector.broadcast %cst_46 : f32 to vector<2x32xf32>
      %35 = arith.addf %34, %33 : vector<2x32xf32>
      %36 = arith.divf %34, %35 : vector<2x32xf32>
      %37 = vector.extract_strided_slice %30 {offsets = [0, 32], sizes = [2, 32], strides = [1, 1]} : vector<2x128xf32> to vector<2x32xf32>
      %38 = arith.negf %37 : vector<2x32xf32>
      %39 = math.exp %38 : vector<2x32xf32>
      %cst_47 = arith.constant 1.000000e+00 : f32
      %40 = vector.broadcast %cst_47 : f32 to vector<2x32xf32>
      %41 = arith.addf %40, %39 : vector<2x32xf32>
      %42 = arith.divf %40, %41 : vector<2x32xf32>
      %43 = vector.extract_strided_slice %30 {offsets = [0, 64], sizes = [2, 32], strides = [1, 1]} : vector<2x128xf32> to vector<2x32xf32>
      %44 = math.tanh %43 : vector<2x32xf32>
      %45 = vector.extract_strided_slice %30 {offsets = [0, 96], sizes = [2, 32], strides = [1, 1]} : vector<2x128xf32> to vector<2x32xf32>
      %46 = arith.negf %45 : vector<2x32xf32>
      %47 = math.exp %46 : vector<2x32xf32>
      %cst_48 = arith.constant 1.000000e+00 : f32
      %48 = vector.broadcast %cst_48 : f32 to vector<2x32xf32>
      %49 = arith.addf %48, %47 : vector<2x32xf32>
      %50 = arith.divf %48, %49 : vector<2x32xf32>
      %51 = arith.mulf %42, %25 : vector<2x32xf32>
      %52 = arith.mulf %36, %44 : vector<2x32xf32>
      %53 = arith.addf %51, %52 : vector<2x32xf32>
      %54 = math.tanh %53 : vector<2x32xf32>
      %55 = arith.mulf %50, %54 : vector<2x32xf32>
      %c0_49 = arith.constant 0 : index
      %c0_50 = arith.constant 0 : index
      %56 = vector.load %arg15[%c0_49, %c0_50] : memref<2x32xf32, #tpu.memory_space<vmem>>, vector<2x32xf32>
      tpu.vector_store %arg15[%c0_49, %c0_50], %55 {strides = array<i32>} : memref<2x32xf32, #tpu.memory_space<vmem>>, vector<2x32xf32>,
      %c0_51 = arith.constant 0 : index
      %c0_52 = arith.constant 0 : index
      %57 = vector.load %arg16[%c0_51, %c0_52] : memref<2x32xf32, #tpu.memory_space<vmem>>, vector<2x32xf32>
      tpu.vector_store %arg16[%c0_51, %c0_52], %53 {strides = array<i32>} : memref<2x32xf32, #tpu.memory_space<vmem>>, vector<2x32xf32>,
      %58 = arith.index_cast %arg19 : i32 to index
      %c0_53 = arith.constant 0 : index
      %c0_54 = arith.constant 0 : index
      %59 = vector.load %arg17[%58, %c0_53, %c0_54] : memref<8x2x32xf32, #tpu.memory_space<vmem>>, vector<1x2x32xf32>
      %60 = vector.shape_cast %59 : vector<1x2x32xf32> to vector<2x32xf32>
      %61 = vector.shape_cast %55 : vector<2x32xf32> to vector<1x2x32xf32>
      tpu.vector_store %arg17[%58, %c0_53, %c0_54], %61 {strides = array<i32>} : memref<8x2x32xf32, #tpu.memory_space<vmem>>, vector<1x2x32xf32>,
      %cst_55 = arith.constant dense<0.000000e+00> : vector<2x32xf32>
      %62 = tpu.matmul %55, %8, %cst_55 {dimension_numbers = #tpu.dot_dimension_numbers<[1], [0], [0], [1], [0, 0, 1, 1], [], []>} : vector<2x32xf32>, vector<32x32xf32>, vector<2x32xf32> -> vector<2x32xf32>
      %63 = arith.index_cast %arg19 : i32 to index
      %c0_56 = arith.constant 0 : index
      %c0_57 = arith.constant 0 : index
      %64 = vector.load %arg18[%63, %c0_56, %c0_57] : memref<8x2x32xf32, #tpu.memory_space<vmem>>, vector<1x2x32xf32>
      %65 = vector.shape_cast %64 : vector<1x2x32xf32> to vector<2x32xf32>
      %66 = vector.shape_cast %62 : vector<2x32xf32> to vector<1x2x32xf32>
      tpu.vector_store %arg18[%63, %c0_56, %c0_57], %66 {strides = array<i32>} : memref<8x2x32xf32, #tpu.memory_space<vmem>>, vector<1x2x32xf32>,
    }
    %c8_i32_28 = arith.constant 8 : i32
    %c0_29 = arith.constant 0 : index
    %c0_30 = arith.constant 0 : index
    %c0_31 = arith.constant 0 : index
    %18 = vector.load %arg17[%c0_29, %c0_30, %c0_31] : memref<8x2x32xf32, #tpu.memory_space<vmem>>, vector<8x2x32xf32>
    %c0_32 = arith.constant 0 : index
    %c0_33 = arith.constant 0 : index
    %c0_34 = arith.constant 0 : index
    %19 = vector.load %arg18[%c0_32, %c0_33, %c0_34] : memref<8x2x32xf32, #tpu.memory_space<vmem>>, vector<8x2x32xf32>
    %c0_i32_35 = arith.constant 0 : i32
    %c5_i32 = arith.constant 5 : i32
    %20 = arith.addi %c0_i32_35, %c5_i32 : i32
    %c1_i32_36 = arith.constant 1 : i32
    scf.for %arg19 = %c0_i32_35 to %20 step %c1_i32_36  : i32 {
      %21 = arith.index_cast %arg19 : i32 to index
      %c0_38 = arith.constant 0 : index
      %c0_39 = arith.constant 0 : index
      %22 = vector.load %arg1[%21, %c0_38, %c0_39] : memref<5x2x16xf32, #tpu.memory_space<vmem>>, vector<1x2x16xf32>
      %23 = vector.shape_cast %22 : vector<1x2x16xf32> to vector<2x16xf32>
      %c0_40 = arith.constant 0 : index
      %c0_41 = arith.constant 0 : index
      %24 = vector.load %arg15[%c0_40, %c0_41] : memref<2x32xf32, #tpu.memory_space<vmem>>, vector<2x32xf32>
      %c0_42 = arith.constant 0 : index
      %c0_43 = arith.constant 0 : index
      %25 = vector.load %arg16[%c0_42, %c0_43] : memref<2x32xf32, #tpu.memory_space<vmem>>, vector<2x32xf32>
      %cst_44 = arith.constant dense<0.000000e+00> : vector<2x32xf32>
      %26 = tpu.matmul %24, %7, %cst_44 {dimension_numbers = #tpu.dot_dimension_numbers<[1], [0], [0], [1], [0, 0, 1, 1], [], []>} : vector<2x32xf32>, vector<32x32xf32>, vector<2x32xf32> -> vector<2x32xf32>
      %27 = vector.shape_cast %26 : vector<2x32xf32> to vector<1x2x32xf32>
      %28 = vector.broadcast %27 : vector<1x2x32xf32> to vector<8x2x32xf32>
      %29 = arith.addf %28, %19 : vector<8x2x32xf32>
      %30 = math.tanh %29 : vector<8x2x32xf32>
      %31 = vector.broadcast %10 : vector<1x1x32xf32> to vector<8x2x32xf32>
      %32 = arith.mulf %30, %31 : vector<8x2x32xf32>
      %cst_45 = arith.constant dense<0.000000e+00> : vector<8x2xf32>
      %33 = vector.multi_reduction <add>, %32, %cst_45 [2] : vector<8x2x32xf32> to vector<8x2xf32>
      %34 = vector.shape_cast %33 : vector<8x2xf32> to vector<8x2x1xf32>
      %cst_46 = arith.constant dense<0xFF800000> : vector<2x1xf32>
      %35 = vector.multi_reduction <maximumf>, %34, %cst_46 [0] : vector<8x2x1xf32> to vector<2x1xf32>
      %36 = vector.shape_cast %35 : vector<2x1xf32> to vector<1x2x1xf32>
      %37 = vector.broadcast %36 : vector<1x2x1xf32> to vector<8x2x1xf32>
      %38 = arith.subf %34, %37 : vector<8x2x1xf32>
      %39 = math.exp %38 : vector<8x2x1xf32>
      %cst_47 = arith.constant dense<0.000000e+00> : vector<2x1xf32>
      %40 = vector.multi_reduction <add>, %39, %cst_47 [0] : vector<8x2x1xf32> to vector<2x1xf32>
      %41 = vector.shape_cast %40 : vector<2x1xf32> to vector<1x2x1xf32>
      %42 = tpu.reciprocal %41 {approx = true} : vector<1x2x1xf32> -> vector<1x2x1xf32>
      %43 = vector.broadcast %42 : vector<1x2x1xf32> to vector<8x2x1xf32>
      %44 = arith.mulf %39, %43 : vector<8x2x1xf32>
      %45 = vector.broadcast %44 : vector<8x2x1xf32> to vector<8x2x32xf32>
      %46 = arith.mulf %45, %18 : vector<8x2x32xf32>
      %cst_48 = arith.constant dense<0.000000e+00> : vector<2x32xf32>
      %47 = vector.multi_reduction <add>, %46, %cst_48 [0] : vector<8x2x32xf32> to vector<2x32xf32>
      %cst_49 = arith.constant dense<0.000000e+00> : vector<2x128xf32>
      %48 = tpu.matmul %23, %3, %cst_49 {dimension_numbers = #tpu.dot_dimension_numbers<[1], [0], [0], [1], [0, 0, 1, 1], [], []>} : vector<2x16xf32>, vector<16x128xf32>, vector<2x128xf32> -> vector<2x128xf32>
      %cst_50 = arith.constant dense<0.000000e+00> : vector<2x128xf32>
      %49 = tpu.matmul %47, %4, %cst_50 {dimension_numbers = #tpu.dot_dimension_numbers<[1], [0], [0], [1], [0, 0, 1, 1], [], []>} : vector<2x32xf32>, vector<32x128xf32>, vector<2x128xf32> -> vector<2x128xf32>
      %50 = arith.addf %48, %49 : vector<2x128xf32>
      %cst_51 = arith.constant dense<0.000000e+00> : vector<2x128xf32>
      %51 = tpu.matmul %24, %5, %cst_51 {dimension_numbers = #tpu.dot_dimension_numbers<[1], [0], [0], [1], [0, 0, 1, 1], [], []>} : vector<2x32xf32>, vector<32x128xf32>, vector<2x128xf32> -> vector<2x128xf32>
      %52 = arith.addf %50, %51 : vector<2x128xf32>
      %53 = vector.broadcast %6 : vector<1x128xf32> to vector<2x128xf32>
      %54 = arith.addf %52, %53 : vector<2x128xf32>
      %55 = vector.extract_strided_slice %54 {offsets = [0, 0], sizes = [2, 32], strides = [1, 1]} : vector<2x128xf32> to vector<2x32xf32>
      %56 = arith.negf %55 : vector<2x32xf32>
      %57 = math.exp %56 : vector<2x32xf32>
      %cst_52 = arith.constant 1.000000e+00 : f32
      %58 = vector.broadcast %cst_52 : f32 to vector<2x32xf32>
      %59 = arith.addf %58, %57 : vector<2x32xf32>
      %60 = arith.divf %58, %59 : vector<2x32xf32>
      %61 = vector.extract_strided_slice %54 {offsets = [0, 32], sizes = [2, 32], strides = [1, 1]} : vector<2x128xf32> to vector<2x32xf32>
      %62 = arith.negf %61 : vector<2x32xf32>
      %63 = math.exp %62 : vector<2x32xf32>
      %cst_53 = arith.constant 1.000000e+00 : f32
      %64 = vector.broadcast %cst_53 : f32 to vector<2x32xf32>
      %65 = arith.addf %64, %63 : vector<2x32xf32>
      %66 = arith.divf %64, %65 : vector<2x32xf32>
      %67 = vector.extract_strided_slice %54 {offsets = [0, 64], sizes = [2, 32], strides = [1, 1]} : vector<2x128xf32> to vector<2x32xf32>
      %68 = math.tanh %67 : vector<2x32xf32>
      %69 = vector.extract_strided_slice %54 {offsets = [0, 96], sizes = [2, 32], strides = [1, 1]} : vector<2x128xf32> to vector<2x32xf32>
      %70 = arith.negf %69 : vector<2x32xf32>
      %71 = math.exp %70 : vector<2x32xf32>
      %cst_54 = arith.constant 1.000000e+00 : f32
      %72 = vector.broadcast %cst_54 : f32 to vector<2x32xf32>
      %73 = arith.addf %72, %71 : vector<2x32xf32>
      %74 = arith.divf %72, %73 : vector<2x32xf32>
      %75 = arith.mulf %66, %25 : vector<2x32xf32>
      %76 = arith.mulf %60, %68 : vector<2x32xf32>
      %77 = arith.addf %75, %76 : vector<2x32xf32>
      %78 = math.tanh %77 : vector<2x32xf32>
      %79 = arith.mulf %74, %78 : vector<2x32xf32>
      %c0_55 = arith.constant 0 : index
      %c0_56 = arith.constant 0 : index
      %80 = vector.load %arg15[%c0_55, %c0_56] : memref<2x32xf32, #tpu.memory_space<vmem>>, vector<2x32xf32>
      tpu.vector_store %arg15[%c0_55, %c0_56], %79 {strides = array<i32>} : memref<2x32xf32, #tpu.memory_space<vmem>>, vector<2x32xf32>,
      %c0_57 = arith.constant 0 : index
      %c0_58 = arith.constant 0 : index
      %81 = vector.load %arg16[%c0_57, %c0_58] : memref<2x32xf32, #tpu.memory_space<vmem>>, vector<2x32xf32>
      tpu.vector_store %arg16[%c0_57, %c0_58], %77 {strides = array<i32>} : memref<2x32xf32, #tpu.memory_space<vmem>>, vector<2x32xf32>,
      %cst_59 = arith.constant dense<0.000000e+00> : vector<2x32xf32>
      %82 = tpu.matmul %79, %11, %cst_59 {dimension_numbers = #tpu.dot_dimension_numbers<[1], [0], [0], [1], [0, 0, 1, 1], [], []>} : vector<2x32xf32>, vector<32x32xf32>, vector<2x32xf32> -> vector<2x32xf32>
      %83 = vector.broadcast %12 : vector<1x32xf32> to vector<2x32xf32>
      %84 = arith.addf %82, %83 : vector<2x32xf32>
      %85 = arith.index_cast %arg19 : i32 to index
      %c0_60 = arith.constant 0 : index
      %c0_61 = arith.constant 0 : index
      %86 = vector.load %arg14[%85, %c0_60, %c0_61] : memref<5x2x32xf32, #tpu.memory_space<vmem>>, vector<1x2x32xf32>
      %87 = vector.shape_cast %86 : vector<1x2x32xf32> to vector<2x32xf32>
      %88 = vector.shape_cast %84 : vector<2x32xf32> to vector<1x2x32xf32>
      tpu.vector_store %arg14[%85, %c0_60, %c0_61], %88 {strides = array<i32>} : memref<5x2x32xf32, #tpu.memory_space<vmem>>, vector<1x2x32xf32>,
    }
    %c5_i32_37 = arith.constant 5 : i32
    return
  }
}

</mosaic_0001>

<llo_original>
// kernel: seq2seq_forward.1
$region0: #{seq2seq_forward.1}
  #allocation0 [shape = 'u32[]', space=smem, size = 0x4, offset = 0x4, fixed_abs, tag = 'smem constant byte address 0x4 - core index']
  #allocation1 [shape = 'u32[144,128]{1,0:T(1,128)}', space=vmem, size = 0x12000, scoped, tag = 'internal scratch']
  #allocation2 [shape = 'f32[2,32]{1,0:T(2,128)}', space=vmem, size = 0x400, scoped, tag = 'scratch operand']
  #allocation3 [shape = 'f32[2,32]{1,0:T(2,128)}', space=vmem, size = 0x400, scoped, tag = 'scratch operand']
  #allocation4 [shape = 'f32[8,2,32]{2,1,0:T(2,128)}', space=vmem, size = 0x2000, scoped, tag = 'scratch operand']
  #allocation5 [shape = 'f32[8,2,32]{2,1,0:T(2,128)}', space=vmem, size = 0x2000, scoped, tag = 'scratch operand']
  %s0 = inlined_call_operand.vmem [shape: f32[8,2,16], index: 0, kind: input, shape index: {}]
  %s1 = inlined_call_operand.vmem [shape: f32[5,2,16], index: 1, kind: input, shape index: {}]
  %s2 = inlined_call_operand.vmem [shape: f32[16,128], index: 2, kind: input, shape index: {}]
  %s3 = inlined_call_operand.vmem [shape: f32[32,128], index: 3, kind: input, shape index: {}]
  %s4 = inlined_call_operand.vmem [shape: f32[1,128], index: 4, kind: input, shape index: {}]
  %s5 = inlined_call_operand.vmem [shape: f32[16,128], index: 5, kind: input, shape index: {}]
  %s6 = inlined_call_operand.vmem [shape: f32[32,128], index: 6, kind: input, shape index: {}]
  %s7 = inlined_call_operand.vmem [shape: f32[32,128], index: 7, kind: input, shape index: {}]
  %s8 = inlined_call_operand.vmem [shape: f32[1,128], index: 8, kind: input, shape index: {}]
  %s9 = inlined_call_operand.vmem [shape: f32[32,32], index: 9, kind: input, shape index: {}]
  %s10 = inlined_call_operand.vmem [shape: f32[32,32], index: 10, kind: input, shape index: {}]
  %s11 = inlined_call_operand.vmem [shape: f32[1,32], index: 11, kind: input, shape index: {}]
  %s12 = inlined_call_operand.vmem [shape: f32[32,32], index: 12, kind: input, shape index: {}]
  %s13 = inlined_call_operand.vmem [shape: f32[1,32], index: 13, kind: input, shape index: {}]
  %s14 = inlined_call_operand.hbm [shape: f32[5,2,32], index: 14, kind: output, shape index: {}]
  %s15 = sld [smem:[#allocation0]]
  $region80: #{seq2seq_forward.1} parent=0
    _
  %s17 = ssub.s32 1, %s15
  %s18 = scalar_select 0, %s17, %s15
  $region1: #{seq2seq_forward.1} parent=0
    #allocation6 [shape = 'u8[5120]{0}', space=vmem, size = 0x1400, scoped, tag = 'output window, operand 0, single buffered']
    #allocation7 [shape = 's32[1]{0}', space=sflag, size = 0x4, scoped, tag = 'scoped memory for seq2seq_forward.1']
    %19 = vsyncpa [#allocation7], 0
    // Predicated region
    $region2: #{seq2seq_forward.1} parent=1 // pred_check
      _
    $region3: #{seq2seq_forward.1} parent=1 // pred_check_branch
      %21 = sbr.rel (0) target = $region5
    $region4: #{seq2seq_forward.1} parent=1 // pred_region
      _
    $region5: #{seq2seq_forward.1} parent=1 // pred_fallthru
      _
    // Predicated region
    $region6: #{seq2seq_forward.1} parent=1 // pred_check
      _
    $region7: #{seq2seq_forward.1} parent=1 // pred_check_branch
      %23 = sbr.rel (0) target = $region9
    $region8: #{seq2seq_forward.1} parent=1 // pred_region
      _
    $region9: #{seq2seq_forward.1} parent=1 // pred_fallthru
      _
    // Predicated region
    $region10: #{seq2seq_forward.1} parent=1 // pred_check
      _
    $region11: #{seq2seq_forward.1} parent=1 // pred_check_branch
      %25 = sbr.rel (0) target = $region13
    $region12: #{seq2seq_forward.1} parent=1 // pred_region
      _
    $region13: #{seq2seq_forward.1} parent=1 // pred_fallthru
      _
    // Predicated region
    $region14: #{seq2seq_forward.1} parent=1 // pred_check
      _
    $region15: #{seq2seq_forward.1} parent=1 // pred_check_branch
      %27 = sbr.rel (0) target = $region17
    $region16: #{seq2seq_forward.1} parent=1 // pred_region
      _
    $region17: #{seq2seq_forward.1} parent=1 // pred_fallthru
      _
    // Predicated region
    $region18: #{seq2seq_forward.1} parent=1 // pred_check
      _
    $region19: #{seq2seq_forward.1} parent=1 // pred_check_branch
      %29 = sbr.rel (0) target = $region21
    $region20: #{seq2seq_forward.1} parent=1 // pred_region
      _
    $region21: #{seq2seq_forward.1} parent=1 // pred_fallthru
      _
    // Predicated region
    $region22: #{seq2seq_forward.1} parent=1 // pred_check
      _
    $region23: #{seq2seq_forward.1} parent=1 // pred_check_branch
      %31 = sbr.rel (0) target = $region25
    $region24: #{seq2seq_forward.1} parent=1 // pred_region
      _
    $region25: #{seq2seq_forward.1} parent=1 // pred_fallthru
      _
    // Predicated region
    $region26: #{seq2seq_forward.1} parent=1 // pred_check
      _
    $region27: #{seq2seq_forward.1} parent=1 // pred_check_branch
      %33 = sbr.rel (0) target = $region29
    $region28: #{seq2seq_forward.1} parent=1 // pred_region
      _
    $region29: #{seq2seq_forward.1} parent=1 // pred_fallthru
      _
    // Predicated region
    $region30: #{seq2seq_forward.1} parent=1 // pred_check
      _
    $region31: #{seq2seq_forward.1} parent=1 // pred_check_branch
      %35 = sbr.rel (0) target = $region33
    $region32: #{seq2seq_forward.1} parent=1 // pred_region
      _
    $region33: #{seq2seq_forward.1} parent=1 // pred_fallthru
      _
    // Predicated region
    $region34: #{seq2seq_forward.1} parent=1 // pred_check
      _
    $region35: #{seq2seq_forward.1} parent=1 // pred_check_branch
      %37 = sbr.rel (0) target = $region37
    $region36: #{seq2seq_forward.1} parent=1 // pred_region
      _
    $region37: #{seq2seq_forward.1} parent=1 // pred_fallthru
      _
    // Predicated region
    $region38: #{seq2seq_forward.1} parent=1 // pred_check
      _
    $region39: #{seq2seq_forward.1} parent=1 // pred_check_branch
      %39 = sbr.rel (0) target = $region41
    $region40: #{seq2seq_forward.1} parent=1 // pred_region
      _
    $region41: #{seq2seq_forward.1} parent=1 // pred_fallthru
      _
    // Predicated region
    $region42: #{seq2seq_forward.1} parent=1 // pred_check
      _
    $region43: #{seq2seq_forward.1} parent=1 // pred_check_branch
      %41 = sbr.rel (0) target = $region45
    $region44: #{seq2seq_forward.1} parent=1 // pred_region
      _
    $region45: #{seq2seq_forward.1} parent=1 // pred_fallthru
      _
    // Predicated region
    $region46: #{seq2seq_forward.1} parent=1 // pred_check
      _
    $region47: #{seq2seq_forward.1} parent=1 // pred_check_branch
      %43 = sbr.rel (0) target = $region49
    $region48: #{seq2seq_forward.1} parent=1 // pred_region
      _
    $region49: #{seq2seq_forward.1} parent=1 // pred_fallthru
      _
    // Predicated region
    $region50: #{seq2seq_forward.1} parent=1 // pred_check
      _
    $region51: #{seq2seq_forward.1} parent=1 // pred_check_branch
      %45 = sbr.rel (0) target = $region53
    $region52: #{seq2seq_forward.1} parent=1 // pred_region
      _
    $region53: #{seq2seq_forward.1} parent=1 // pred_fallthru
      _
    // Predicated region
    $region54: #{seq2seq_forward.1} parent=1 // pred_check
      _
    $region55: #{seq2seq_forward.1} parent=1 // pred_check_branch
      %47 = sbr.rel (0) target = $region57
    $region56: #{seq2seq_forward.1} parent=1 // pred_region
      _
    $region57: #{seq2seq_forward.1} parent=1 // pred_fallthru
      _
    %v48 = vld [vmem:[%s2] sm:$0xff]
    %v49 = vld [vmem:[%s2 + $0x8] sm:$0xff]
    %v50 = vld [vmem:[%s3] sm:$0xff]
    %v51 = vld [vmem:[%s3 + $0x8] sm:$0xff]
    %v52 = vld [vmem:[%s3 + $0x10] sm:$0xff]
    %v53 = vld [vmem:[%s3 + $0x18] sm:$0xff]
    %v54 = vld [vmem:[%s4] sm:$0x1]
    %v55 = vld [vmem:[%s5] sm:$0xff]
    %v56 = vld [vmem:[%s5 + $0x8] sm:$0xff]
    %v57 = vld [vmem:[%s6] sm:$0xff]
    %v58 = vld [vmem:[%s6 + $0x8] sm:$0xff]
    %v59 = vld [vmem:[%s6 + $0x10] sm:$0xff]
    %v60 = vld [vmem:[%s6 + $0x18] sm:$0xff]
    %v61 = vld [vmem:[%s7] sm:$0xff]
    %v62 = vld [vmem:[%s7 + $0x8] sm:$0xff]
    %v63 = vld [vmem:[%s7 + $0x10] sm:$0xff]
    %v64 = vld [vmem:[%s7 + $0x18] sm:$0xff]
    %v65 = vld [vmem:[%s8] sm:$0x1]
    %v66 = vld [vmem:[%s9] sm:$0xff]
    %v67 = vld [vmem:[%s9 + $0x8] sm:$0xff]
    %v68 = vld [vmem:[%s9 + $0x10] sm:$0xff]
    %v69 = vld [vmem:[%s9 + $0x18] sm:$0xff]
    %v70 = vld [vmem:[%s10] sm:$0xff]
    %v71 = vld [vmem:[%s10 + $0x8] sm:$0xff]
    %v72 = vld [vmem:[%s10 + $0x10] sm:$0xff]
    %v73 = vld [vmem:[%s10 + $0x18] sm:$0xff]
    %v74 = vld [vmem:[%s11] sm:$0x1]
    %v75 = vld [vmem:[%s12] sm:$0xff]
    %v76 = vld [vmem:[%s12 + $0x8] sm:$0xff]
    %v77 = vld [vmem:[%s12 + $0x10] sm:$0xff]
    %v78 = vld [vmem:[%s12 + $0x18] sm:$0xff]
    %v79 = vld [vmem:[%s13] sm:$0x1]
    %vm80 = vcmask 254976
    %81 = vst.msk [vmem:[#allocation2] sm:$0x3] %vm80, 0.0
    %82 = vst.msk [vmem:[#allocation3] sm:$0x3] %vm80, 0.0
    loop: start=0, step=1, limit=8
    $region58: #{seq2seq_forward.1} parent=1 // loop_pre_header
      _
    $region59: #{seq2seq_forward.1} parent=1 // loop_header
      %s84 = sphi 0, %s88
      %p85 = scmp.ge.s32.totalorder %s84, 8
    $region60: #{seq2seq_forward.1} parent=1 // loop_header_branch
      %87 = sbr.rel (%p85) target = $region64
    $region61: #{seq2seq_forward.1} parent=1 // loop_body
      %s89 = smul.u32 %s84, 2
      %s90 = scalar_lea.vmem %s0, %s89
      %v91 = vld [vmem:[%s90] sm:$0x3]
      %v92 = vld [vmem:[#allocation2] sm:$0x3]
      %v93 = vld [vmem:[#allocation3] sm:$0x3]
      %vm94 = vcmask 261120
      %v96 = vsel %vm94, %v92, 0
      %98 = vmatprep.subr.mxu0 0.0
      %99 = vmatpush1.msra.mxu0 0.0
      %100 = vmatprep.subr.mxu0 0.0
      %101 = vmatpush1.msra.mxu0 0.0
      %102 = vmatprep.subr.mxu0 0.0
      %103 = vmatpush1.msra.mxu0 0.0
      %104 = vmatprep.subr.mxu0 0.0
      %105 = vmatpush1.msra.mxu0 0.0
      %106 = vmatprep.subr.mxu0 0.0
      %107 = vmatpush1.msra.mxu0 0.0
      %108 = vmatprep.subr.mxu0 0.0
      %109 = vmatpush1.msra.mxu0 0.0
      %110 = vmatprep.subr.mxu0 0.0
      %111 = vmatpush1.msra.mxu0 0.0
      %112 = vmatprep.subr.mxu0 0.0
      %113 = vmatpush1.msra.mxu0 0.0
      %114 = vmatprep.subr.mxu0 0.0
      %115 = vmatpush1.msra.mxu0 0.0
      %116 = vmatprep.subr.mxu0 0.0
      %117 = vmatpush1.msra.mxu0 0.0
      %118 = vmatprep.subr.mxu0 0.0
      %119 = vmatpush1.msra.mxu0 0.0
      %120 = vmatprep.subr.mxu0 0.0
      %121 = vmatpush1.msra.mxu0 0.0
      %122 = vmatprep.subr.mxu0 0.0
      %123 = vmatpush1.msra.mxu0 %v53
      %124 = vmatprep.subr.mxu0 0.0
      %125 = vmatpush1.msra.mxu0 %v52
      %126 = vmatprep.subr.mxu0 0.0
      %127 = vmatpush1.msra.mxu0 %v51
      %128 = vmatprep.subr.mxu0 0.0
      %129 = vmatpush1.msra.mxu0 %v50
      %130 = vmatprep.subr.mxu0 0.0
      %131 = vmatpush2.msra.mxu0 0.0
      %132 = vmatprep.subr.mxu0 0.0
      %133 = vmatpush2.msra.mxu0 0.0
      %134 = vmatprep.subr.mxu0 0.0
      %135 = vmatpush2.msra.mxu0 0.0
      %136 = vmatprep.subr.mxu0 0.0
      %137 = vmatpush2.msra.mxu0 0.0
      %138 = vmatprep.subr.mxu0 0.0
      %139 = vmatpush2.msra.mxu0 0.0
      %140 = vmatprep.subr.mxu0 0.0
      %141 = vmatpush2.msra.mxu0 0.0
      %142 = vmatprep.subr.mxu0 0.0
      %143 = vmatpush2.msra.mxu0 0.0
      %144 = vmatprep.subr.mxu0 0.0
      %145 = vmatpush2.msra.mxu0 0.0
      %146 = vmatprep.subr.mxu0 0.0
      %147 = vmatpush2.msra.mxu0 0.0
      %148 = vmatprep.subr.mxu0 0.0
      %149 = vmatpush2.msra.mxu0 0.0
      %150 = vmatprep.subr.mxu0 0.0
      %151 = vmatpush2.msra.mxu0 0.0
      %152 = vmatprep.subr.mxu0 0.0
      %153 = vmatpush2.msra.mxu0 0.0
      %154 = vmatprep.subr.mxu0 0.0
      %155 = vmatpush2.msra.mxu0 0.0
      %156 = vmatprep.subr.mxu0 0.0
      %157 = vmatpush2.msra.mxu0 0.0
      %158 = vmatprep.subr.mxu0 0.0
      %159 = vmatpush2.msra.mxu0 0.0
      %160 = vmatprep.subr.mxu0 0.0
      %161 = vmatpush2.msra.mxu0 0.0
      %162 = vmatprep.mubr.f32.mxu0 0.0
      %163 = vmatmul.mubr.f32.gmra.mxu0 %v96
      %v164 = vpop.f32.mrf.mxu0
      %v165 = vadd.f32 0.0, %v164
      %v166 = vpop.f32.mrf.mxu0
      %167 = vdwg.mxu0
      %vm168 = vcmask 130048
      %v170 = vsel %vm168, %v91, 0
      %172 = vmatprep.subr.mxu0 0.0
      %173 = vmatpush1.msra.mxu0 0.0
      %174 = vmatprep.subr.mxu0 0.0
      %175 = vmatpush1.msra.mxu0 0.0
      %176 = vmatprep.subr.mxu0 0.0
      %177 = vmatpush1.msra.mxu0 0.0
      %178 = vmatprep.subr.mxu0 0.0
      %179 = vmatpush1.msra.mxu0 0.0
      %180 = vmatprep.subr.mxu0 0.0
      %181 = vmatpush1.msra.mxu0 0.0
      %182 = vmatprep.subr.mxu0 0.0
      %183 = vmatpush1.msra.mxu0 0.0
      %184 = vmatprep.subr.mxu0 0.0
      %185 = vmatpush1.msra.mxu0 0.0
      %186 = vmatprep.subr.mxu0 0.0
      %187 = vmatpush1.msra.mxu0 0.0
      %188 = vmatprep.subr.mxu0 0.0
      %189 = vmatpush1.msra.mxu0 0.0
      %190 = vmatprep.subr.mxu0 0.0
      %191 = vmatpush1.msra.mxu0 0.0
      %192 = vmatprep.subr.mxu0 0.0
      %193 = vmatpush1.msra.mxu0 0.0
      %194 = vmatprep.subr.mxu0 0.0
      %195 = vmatpush1.msra.mxu0 0.0
      %196 = vmatprep.subr.mxu0 0.0
      %197 = vmatpush1.msra.mxu0 0.0
      %198 = vmatprep.subr.mxu0 0.0
      %199 = vmatpush1.msra.mxu0 0.0
      %200 = vmatprep.subr.mxu0 0.0
      %201 = vmatpush1.msra.mxu0 %v49
      %202 = vmatprep.subr.mxu0 0.0
      %203 = vmatpush1.msra.mxu0 %v48
      %204 = vmatprep.subr.mxu0 0.0
      %205 = vmatpush2.msra.mxu0 0.0
      %206 = vmatprep.subr.mxu0 0.0
      %207 = vmatpush2.msra.mxu0 0.0
      %208 = vmatprep.subr.mxu0 0.0
      %209 = vmatpush2.msra.mxu0 0.0
      %210 = vmatprep.subr.mxu0 0.0
      %211 = vmatpush2.msra.mxu0 0.0
      %212 = vmatprep.subr.mxu0 0.0
      %213 = vmatpush2.msra.mxu0 0.0
      %214 = vmatprep.subr.mxu0 0.0
      %215 = vmatpush2.msra.mxu0 0.0
      %216 = vmatprep.subr.mxu0 0.0
      %217 = vmatpush2.msra.mxu0 0.0
      %218 = vmatprep.subr.mxu0 0.0
      %219 = vmatpush2.msra.mxu0 0.0
      %220 = vmatprep.subr.mxu0 0.0
      %221 = vmatpush2.msra.mxu0 0.0
      %222 = vmatprep.subr.mxu0 0.0
      %223 = vmatpush2.msra.mxu0 0.0
      %224 = vmatprep.subr.mxu0 0.0
      %225 = vmatpush2.msra.mxu0 0.0
      %226 = vmatprep.subr.mxu0 0.0
      %227 = vmatpush2.msra.mxu0 0.0
      %228 = vmatprep.subr.mxu0 0.0
      %229 = vmatpush2.msra.mxu0 0.0
      %230 = vmatprep.subr.mxu0 0.0
      %231 = vmatpush2.msra.mxu0 0.0
      %232 = vmatprep.subr.mxu0 0.0
      %233 = vmatpush2.msra.mxu0 0.0
      %234 = vmatprep.subr.mxu0 0.0
      %235 = vmatpush2.msra.mxu0 0.0
      %236 = vmatprep.mubr.f32.mxu0 0.0
      %237 = vmatmul.mubr.f32.gmra.mxu0 %v170
      %v238 = vpop.f32.mrf.mxu0
      %v239 = vadd.f32 %v165, %v238
      %v240 = vpop.f32.mrf.mxu0
      %241 = vdwg.mxu0
      %v243 = vlaneseq
      %v244 = vshrl.u32 %v243, 7
      %v245 = vsub.s32 0, %v244
      %v246 = vrot.slane %v54, %v245
      %v248 = vadd.f32 %v239, %v246
      %v249 = vxor.u32 %v248, 2147483648
      %v250 = vmul.f32 %v249, 1.442695
      %v251 = vpow.pop %v250
      %v252 = vadd.f32 %v251, 1.0
      %v253 = vrcp.pop %v252
      %v254 = vmul.f32 1.0, %v253
      %v255 = vtanh.pop %v248
      %257 = vrot.lane.b32.xlu0 %v93, 32
      %v258 = vpop.permute.xlu0 %257
      %v260 = vmul.f32 %v254, %v258
      %262 = vrot.lane.b32.xlu0 %v255, 64
      %v263 = vpop.permute.xlu0 %262
      %v265 = vmul.f32 %v254, %v263
      %267 = vrot.lane.b32.xlu0 %v265, 32
      %v268 = vpop.permute.xlu0 %267
      %v270 = vadd.f32 %v260, %v268
      %v271 = vtanh.pop %v270
      %273 = vrot.lane.b32.xlu0 %v271, 64
      %v274 = vpop.permute.xlu0 %273
      %v276 = vmul.f32 %v254, %v274
      %278 = vrot.lane.b32.xlu0 %v276, 32
      %v279 = vpop.permute.xlu0 %278
      %281 = vst.msk [vmem:[#allocation2] sm:$0x3] %vm80, %v279
      %283 = vrot.lane.b32.xlu0 %v270, 96
      %v284 = vpop.permute.xlu0 %283
      %286 = vst.msk [vmem:[#allocation3] sm:$0x3] %vm80, %v284
      %s287 = scalar_lea.vmem [#allocation4], %s89
      %288 = vst.msk [vmem:[%s287] sm:$0x3] %vm80, %v279
      %v289 = vsel %vm94, %v279, 0
      %291 = vmatprep.subr.mxu0 0.0
      %292 = vmatpush1.msra.mxu0 0.0
      %293 = vmatprep.subr.mxu0 0.0
      %294 = vmatpush1.msra.mxu0 0.0
      %295 = vmatprep.subr.mxu0 0.0
      %296 = vmatpush1.msra.mxu0 0.0
      %297 = vmatprep.subr.mxu0 0.0
      %298 = vmatpush1.msra.mxu0 0.0
      %299 = vmatprep.subr.mxu0 0.0
      %300 = vmatpush1.msra.mxu0 0.0
      %301 = vmatprep.subr.mxu0 0.0
      %302 = vmatpush1.msra.mxu0 0.0
      %303 = vmatprep.subr.mxu0 0.0
      %304 = vmatpush1.msra.mxu0 0.0
      %305 = vmatprep.subr.mxu0 0.0
      %306 = vmatpush1.msra.mxu0 0.0
      %307 = vmatprep.subr.mxu0 0.0
      %308 = vmatpush1.msra.mxu0 0.0
      %309 = vmatprep.subr.mxu0 0.0
      %310 = vmatpush1.msra.mxu0 0.0
      %311 = vmatprep.subr.mxu0 0.0
      %312 = vmatpush1.msra.mxu0 0.0
      %313 = vmatprep.subr.mxu0 0.0
      %314 = vmatpush1.msra.mxu0 0.0
      %315 = vmatprep.subr.mxu0 0.0
      %316 = vmatpush1.msra.mxu0 %v73
      %317 = vmatprep.subr.mxu0 0.0
      %318 = vmatpush1.msra.mxu0 %v72
      %319 = vmatprep.subr.mxu0 0.0
      %320 = vmatpush1.msra.mxu0 %v71
      %321 = vmatprep.subr.mxu0 0.0
      %322 = vmatpush1.msra.mxu0 %v70
      %323 = vmatprep.subr.mxu0 0.0
      %324 = vmatpush2.msra.mxu0 0.0
      %325 = vmatprep.subr.mxu0 0.0
      %326 = vmatpush2.msra.mxu0 0.0
      %327 = vmatprep.subr.mxu0 0.0
      %328 = vmatpush2.msra.mxu0 0.0
      %329 = vmatprep.subr.mxu0 0.0
      %330 = vmatpush2.msra.mxu0 0.0
      %331 = vmatprep.subr.mxu0 0.0
      %332 = vmatpush2.msra.mxu0 0.0
      %333 = vmatprep.subr.mxu0 0.0
      %334 = vmatpush2.msra.mxu0 0.0
      %335 = vmatprep.subr.mxu0 0.0
      %336 = vmatpush2.msra.mxu0 0.0
      %337 = vmatprep.subr.mxu0 0.0
      %338 = vmatpush2.msra.mxu0 0.0
      %339 = vmatprep.subr.mxu0 0.0
      %340 = vmatpush2.msra.mxu0 0.0
      %341 = vmatprep.subr.mxu0 0.0
      %342 = vmatpush2.msra.mxu0 0.0
      %343 = vmatprep.subr.mxu0 0.0
      %344 = vmatpush2.msra.mxu0 0.0
      %345 = vmatprep.subr.mxu0 0.0
      %346 = vmatpush2.msra.mxu0 0.0
      %347 = vmatprep.subr.mxu0 0.0
      %348 = vmatpush2.msra.mxu0 0.0
      %349 = vmatprep.subr.mxu0 0.0
      %350 = vmatpush2.msra.mxu0 0.0
      %351 = vmatprep.subr.mxu0 0.0
      %352 = vmatpush2.msra.mxu0 0.0
      %353 = vmatprep.subr.mxu0 0.0
      %354 = vmatpush2.msra.mxu0 0.0
      %355 = vmatprep.mubr.f32.mxu0 0.0
      %356 = vmatmul.mubr.f32.gmra.mxu0 %v289
      %v357 = vpop.f32.mrf.mxu0
      %v358 = vadd.f32 0.0, %v357
      %v359 = vpop.f32.mrf.mxu0
      %360 = vdwg.mxu0
      %s361 = scalar_lea.vmem [#allocation5], %s89
      %362 = vst.msk [vmem:[%s361] sm:$0x3] %vm80, %v358
    $region62: #{seq2seq_forward.1} parent=1 // loop_footer
      %s88 = sadd.s32 1, %s84
    $region63: #{seq2seq_forward.1} parent=1 // loop_footer_branch
      %83 = sbr.rel target = $region59
    $region64: #{seq2seq_forward.1} parent=1 // loop_exit
      _
    %v363 = vld [vmem:[#allocation4] sm:$0x3]
    %v364 = vld [vmem:[#allocation4 + $0x2] sm:$0x3]
    %v365 = vld [vmem:[#allocation4 + $0x4] sm:$0x3]
    %v366 = vld [vmem:[#allocation4 + $0x6] sm:$0x3]
    %v367 = vld [vmem:[#allocation4 + $0x8] sm:$0x3]
    %v368 = vld [vmem:[#allocation4 + $0xa] sm:$0x3]
    %v369 = vld [vmem:[#allocation4 + $0xc] sm:$0x3]
    %v370 = vld [vmem:[#allocation4 + $0xe] sm:$0x3]
    %v371 = vld [vmem:[#allocation5] sm:$0x3]
    %v372 = vld [vmem:[#allocation5 + $0x2] sm:$0x3]
    %v373 = vld [vmem:[#allocation5 + $0x4] sm:$0x3]
    %v374 = vld [vmem:[#allocation5 + $0x6] sm:$0x3]
    %v375 = vld [vmem:[#allocation5 + $0x8] sm:$0x3]
    %v376 = vld [vmem:[#allocation5 + $0xa] sm:$0x3]
    %v377 = vld [vmem:[#allocation5 + $0xc] sm:$0x3]
    %v378 = vld [vmem:[#allocation5 + $0xe] sm:$0x3]
    loop: start=0, step=1, limit=5
    $region65: #{seq2seq_forward.1} parent=1 // loop_pre_header
      _
    $region66: #{seq2seq_forward.1} parent=1 // loop_header
      %s380 = sphi 0, %s384
      %p381 = scmp.ge.s32.totalorder %s380, 5
    $region67: #{seq2seq_forward.1} parent=1 // loop_header_branch
      %383 = sbr.rel (%p381) target = $region71
    $region68: #{seq2seq_forward.1} parent=1 // loop_body
      %s385 = smul.u32 %s380, 2
      %s386 = scalar_lea.vmem %s1, %s385
      %v387 = vld [vmem:[%s386] sm:$0x3]
      %v388 = vld [vmem:[#allocation2] sm:$0x3]
      %v389 = vld [vmem:[#allocation3] sm:$0x3]
      %vm390 = vcmask 261120
      %v392 = vsel %vm390, %v388, 0
      %394 = vmatprep.subr.mxu0 0.0
      %395 = vmatpush1.msra.mxu0 0.0
      %396 = vmatprep.subr.mxu0 0.0
      %397 = vmatpush1.msra.mxu0 0.0
      %398 = vmatprep.subr.mxu0 0.0
      %399 = vmatpush1.msra.mxu0 0.0
      %400 = vmatprep.subr.mxu0 0.0
      %401 = vmatpush1.msra.mxu0 0.0
      %402 = vmatprep.subr.mxu0 0.0
      %403 = vmatpush1.msra.mxu0 0.0
      %404 = vmatprep.subr.mxu0 0.0
      %405 = vmatpush1.msra.mxu0 0.0
      %406 = vmatprep.subr.mxu0 0.0
      %407 = vmatpush1.msra.mxu0 0.0
      %408 = vmatprep.subr.mxu0 0.0
      %409 = vmatpush1.msra.mxu0 0.0
      %410 = vmatprep.subr.mxu0 0.0
      %411 = vmatpush1.msra.mxu0 0.0
      %412 = vmatprep.subr.mxu0 0.0
      %413 = vmatpush1.msra.mxu0 0.0
      %414 = vmatprep.subr.mxu0 0.0
      %415 = vmatpush1.msra.mxu0 0.0
      %416 = vmatprep.subr.mxu0 0.0
      %417 = vmatpush1.msra.mxu0 0.0
      %418 = vmatprep.subr.mxu0 0.0
      %419 = vmatpush1.msra.mxu0 %v69
      %420 = vmatprep.subr.mxu0 0.0
      %421 = vmatpush1.msra.mxu0 %v68
      %422 = vmatprep.subr.mxu0 0.0
      %423 = vmatpush1.msra.mxu0 %v67
      %424 = vmatprep.subr.mxu0 0.0
      %425 = vmatpush1.msra.mxu0 %v66
      %426 = vmatprep.subr.mxu0 0.0
      %427 = vmatpush2.msra.mxu0 0.0
      %428 = vmatprep.subr.mxu0 0.0
      %429 = vmatpush2.msra.mxu0 0.0
      %430 = vmatprep.subr.mxu0 0.0
      %431 = vmatpush2.msra.mxu0 0.0
      %432 = vmatprep.subr.mxu0 0.0
      %433 = vmatpush2.msra.mxu0 0.0
      %434 = vmatprep.subr.mxu0 0.0
      %435 = vmatpush2.msra.mxu0 0.0
      %436 = vmatprep.subr.mxu0 0.0
      %437 = vmatpush2.msra.mxu0 0.0
      %438 = vmatprep.subr.mxu0 0.0
      %439 = vmatpush2.msra.mxu0 0.0
      %440 = vmatprep.subr.mxu0 0.0
      %441 = vmatpush2.msra.mxu0 0.0
      %442 = vmatprep.subr.mxu0 0.0
      %443 = vmatpush2.msra.mxu0 0.0
      %444 = vmatprep.subr.mxu0 0.0
      %445 = vmatpush2.msra.mxu0 0.0
      %446 = vmatprep.subr.mxu0 0.0
      %447 = vmatpush2.msra.mxu0 0.0
      %448 = vmatprep.subr.mxu0 0.0
      %449 = vmatpush2.msra.mxu0 0.0
      %450 = vmatprep.subr.mxu0 0.0
      %451 = vmatpush2.msra.mxu0 0.0
      %452 = vmatprep.subr.mxu0 0.0
      %453 = vmatpush2.msra.mxu0 0.0
      %454 = vmatprep.subr.mxu0 0.0
      %455 = vmatpush2.msra.mxu0 0.0
      %456 = vmatprep.subr.mxu0 0.0
      %457 = vmatpush2.msra.mxu0 0.0
      %458 = vmatprep.mubr.f32.mxu0 0.0
      %459 = vmatmul.mubr.f32.gmra.mxu0 %v392
      %v460 = vpop.f32.mrf.mxu0
      %v461 = vadd.f32 0.0, %v460
      %v462 = vpop.f32.mrf.mxu0
      %463 = vdwg.mxu0
      %v464 = vadd.f32 %v461, %v371
      %v465 = vadd.f32 %v461, %v372
      %v466 = vadd.f32 %v461, %v373
      %v467 = vadd.f32 %v461, %v374
      %v468 = vadd.f32 %v461, %v375
      %v469 = vadd.f32 %v461, %v376
      %v470 = vadd.f32 %v461, %v377
      %v471 = vadd.f32 %v461, %v378
      %v472 = vtanh.pop %v464
      %v473 = vtanh.pop %v465
      %v474 = vtanh.pop %v466
      %v475 = vtanh.pop %v467
      %v476 = vtanh.pop %v468
      %v477 = vtanh.pop %v469
      %v478 = vtanh.pop %v470
      %v479 = vtanh.pop %v471
      %v481 = vlaneseq
      %v482 = vshrl.u32 %v481, 7
      %v483 = vsub.s32 0, %v482
      %v484 = vrot.slane %v74, %v483
      %v486 = vmul.f32 %v472, %v484
      %v487 = vmul.f32 %v473, %v484
      %v488 = vmul.f32 %v474, %v484
      %v489 = vmul.f32 %v475, %v484
      %v490 = vmul.f32 %v476, %v484
      %v491 = vmul.f32 %v477, %v484
      %v492 = vmul.f32 %v478, %v484
      %v493 = vmul.f32 %v479, %v484
      %v494 = vsel %vm80, %v486, 0.0
      %495 = vadd.xlane.f32.xlu0 %v494
      %v496 = vpop.xlane.xlu0 %495
      %v497 = vsel %vm80, %v487, 0.0
      %498 = vadd.xlane.f32.xlu0 %v497
      %v499 = vpop.xlane.xlu0 %498
      %v500 = vsel %vm80, %v488, 0.0
      %501 = vadd.xlane.f32.xlu0 %v500
      %v502 = vpop.xlane.xlu0 %501
      %v503 = vsel %vm80, %v489, 0.0
      %504 = vadd.xlane.f32.xlu0 %v503
      %v505 = vpop.xlane.xlu0 %504
      %v506 = vsel %vm80, %v490, 0.0
      %507 = vadd.xlane.f32.xlu0 %v506
      %v508 = vpop.xlane.xlu0 %507
      %v509 = vsel %vm80, %v491, 0.0
      %510 = vadd.xlane.f32.xlu0 %v509
      %v511 = vpop.xlane.xlu0 %510
      %v512 = vsel %vm80, %v492, 0.0
      %513 = vadd.xlane.f32.xlu0 %v512
      %v514 = vpop.xlane.xlu0 %513
      %v515 = vsel %vm80, %v493, 0.0
      %516 = vadd.xlane.f32.xlu0 %v515
      %v517 = vpop.xlane.xlu0 %516
      %vm518 = vcmask 1041408
      %v519 = vsel %vm518, %v496, -inf
      %v520 = vsel %vm518, %v499, -inf
      %v521 = vsel %vm518, %v502, -inf
      %v522 = vsel %vm518, %v505, -inf
      %v523 = vsel %vm518, %v508, -inf
      %v524 = vmax.f32 %v519, %v523
      %v525 = vsel %vm518, %v511, -inf
      %v526 = vmax.f32 %v520, %v525
      %v527 = vsel %vm518, %v514, -inf
      %v528 = vmax.f32 %v521, %v527
      %v529 = vsel %vm518, %v517, -inf
      %v530 = vmax.f32 %v522, %v529
      %v531 = vmax.f32 %v524, %v526
      %v532 = vmax.f32 %v528, %v530
      %v533 = vmax.f32 %v531, %v532
      %v534 = vsub.f32 %v496, %v533
      %v535 = vsub.f32 %v499, %v533
      %v536 = vsub.f32 %v502, %v533
      %v537 = vsub.f32 %v505, %v533
      %v538 = vsub.f32 %v508, %v533
      %v539 = vsub.f32 %v511, %v533
      %v540 = vsub.f32 %v514, %v533
      %v541 = vsub.f32 %v517, %v533
      %v542 = vmul.f32 %v534, 1.442695
      %v543 = vpow.pop %v542
      %v544 = vmul.f32 %v535, 1.442695
      %v545 = vpow.pop %v544
      %v546 = vmul.f32 %v536, 1.442695
      %v547 = vpow.pop %v546
      %v548 = vmul.f32 %v537, 1.442695
      %v549 = vpow.pop %v548
      %v550 = vmul.f32 %v538, 1.442695
      %v551 = vpow.pop %v550
      %v552 = vmul.f32 %v539, 1.442695
      %v553 = vpow.pop %v552
      %v554 = vmul.f32 %v540, 1.442695
      %v555 = vpow.pop %v554
      %v556 = vmul.f32 %v541, 1.442695
      %v557 = vpow.pop %v556
      %v558 = vsel %vm518, %v543, 0.0
      %v559 = vsel %vm518, %v545, 0.0
      %v560 = vadd.f32 %v558, %v559
      %v561 = vsel %vm518, %v547, 0.0
      %v562 = vadd.f32 %v560, %v561
      %v563 = vsel %vm518, %v549, 0.0
      %v564 = vadd.f32 %v562, %v563
      %v565 = vsel %vm518, %v551, 0.0
      %v566 = vadd.f32 %v564, %v565
      %v567 = vsel %vm518, %v553, 0.0
      %v568 = vadd.f32 %v566, %v567
      %v569 = vsel %vm518, %v555, 0.0
      %v570 = vadd.f32 %v568, %v569
      %v571 = vsel %vm518, %v557, 0.0
      %v572 = vadd.f32 %v570, %v571
      %v573 = vrcp.pop %v572
      %v574 = vmul.f32 %v543, %v573
      %v575 = vmul.f32 %v545, %v573
      %v576 = vmul.f32 %v547, %v573
      %v577 = vmul.f32 %v549, %v573
      %v578 = vmul.f32 %v551, %v573
      %v579 = vmul.f32 %v553, %v573
      %v580 = vmul.f32 %v555, %v573
      %v581 = vmul.f32 %v557, %v573
      %v582 = vmul.f32 %v574, %v363
      %v583 = vmul.f32 %v575, %v364
      %v584 = vmul.f32 %v576, %v365
      %v585 = vmul.f32 %v577, %v366
      %v586 = vmul.f32 %v578, %v367
      %v587 = vmul.f32 %v579, %v368
      %v588 = vmul.f32 %v580, %v369
      %v589 = vmul.f32 %v581, %v370
      %v590 = vsel %vm80, %v582, 0.0
      %v591 = vsel %vm80, %v583, 0.0
      %v592 = vadd.f32 %v590, %v591
      %v593 = vsel %vm80, %v584, 0.0
      %v594 = vadd.f32 %v592, %v593
      %v595 = vsel %vm80, %v585, 0.0
      %v596 = vadd.f32 %v594, %v595
      %v597 = vsel %vm80, %v586, 0.0
      %v598 = vadd.f32 %v596, %v597
      %v599 = vsel %vm80, %v587, 0.0
      %v600 = vadd.f32 %v598, %v599
      %v601 = vsel %vm80, %v588, 0.0
      %v602 = vadd.f32 %v600, %v601
      %v603 = vsel %vm80, %v589, 0.0
      %v604 = vadd.f32 %v602, %v603
      %v606 = vsel %vm390, %v604, 0
      %608 = vmatprep.subr.mxu0 0.0
      %609 = vmatpush1.msra.mxu0 0.0
      %610 = vmatprep.subr.mxu0 0.0
      %611 = vmatpush1.msra.mxu0 0.0
      %612 = vmatprep.subr.mxu0 0.0
      %613 = vmatpush1.msra.mxu0 0.0
      %614 = vmatprep.subr.mxu0 0.0
      %615 = vmatpush1.msra.mxu0 0.0
      %616 = vmatprep.subr.mxu0 0.0
      %617 = vmatpush1.msra.mxu0 0.0
      %618 = vmatprep.subr.mxu0 0.0
      %619 = vmatpush1.msra.mxu0 0.0
      %620 = vmatprep.subr.mxu0 0.0
      %621 = vmatpush1.msra.mxu0 0.0
      %622 = vmatprep.subr.mxu0 0.0
      %623 = vmatpush1.msra.mxu0 0.0
      %624 = vmatprep.subr.mxu0 0.0
      %625 = vmatpush1.msra.mxu0 0.0
      %626 = vmatprep.subr.mxu0 0.0
      %627 = vmatpush1.msra.mxu0 0.0
      %628 = vmatprep.subr.mxu0 0.0
      %629 = vmatpush1.msra.mxu0 0.0
      %630 = vmatprep.subr.mxu0 0.0
      %631 = vmatpush1.msra.mxu0 0.0
      %632 = vmatprep.subr.mxu0 0.0
      %633 = vmatpush1.msra.mxu0 %v60
      %634 = vmatprep.subr.mxu0 0.0
      %635 = vmatpush1.msra.mxu0 %v59
      %636 = vmatprep.subr.mxu0 0.0
      %637 = vmatpush1.msra.mxu0 %v58
      %638 = vmatprep.subr.mxu0 0.0
      %639 = vmatpush1.msra.mxu0 %v57
      %640 = vmatprep.subr.mxu0 0.0
      %641 = vmatpush2.msra.mxu0 0.0
      %642 = vmatprep.subr.mxu0 0.0
      %643 = vmatpush2.msra.mxu0 0.0
      %644 = vmatprep.subr.mxu0 0.0
      %645 = vmatpush2.msra.mxu0 0.0
      %646 = vmatprep.subr.mxu0 0.0
      %647 = vmatpush2.msra.mxu0 0.0
      %648 = vmatprep.subr.mxu0 0.0
      %649 = vmatpush2.msra.mxu0 0.0
      %650 = vmatprep.subr.mxu0 0.0
      %651 = vmatpush2.msra.mxu0 0.0
      %652 = vmatprep.subr.mxu0 0.0
      %653 = vmatpush2.msra.mxu0 0.0
      %654 = vmatprep.subr.mxu0 0.0
      %655 = vmatpush2.msra.mxu0 0.0
      %656 = vmatprep.subr.mxu0 0.0
      %657 = vmatpush2.msra.mxu0 0.0
      %658 = vmatprep.subr.mxu0 0.0
      %659 = vmatpush2.msra.mxu0 0.0
      %660 = vmatprep.subr.mxu0 0.0
      %661 = vmatpush2.msra.mxu0 0.0
      %662 = vmatprep.subr.mxu0 0.0
      %663 = vmatpush2.msra.mxu0 0.0
      %664 = vmatprep.subr.mxu0 0.0
      %665 = vmatpush2.msra.mxu0 0.0
      %666 = vmatprep.subr.mxu0 0.0
      %667 = vmatpush2.msra.mxu0 0.0
      %668 = vmatprep.subr.mxu0 0.0
      %669 = vmatpush2.msra.mxu0 0.0
      %670 = vmatprep.subr.mxu0 0.0
      %671 = vmatpush2.msra.mxu0 0.0
      %672 = vmatprep.mubr.f32.mxu0 0.0
      %673 = vmatmul.mubr.f32.gmra.mxu0 %v606
      %v674 = vpop.f32.mrf.mxu0
      %v675 = vadd.f32 0.0, %v674
      %v676 = vpop.f32.mrf.mxu0
      %677 = vdwg.mxu0
      %vm678 = vcmask 130048
      %v680 = vsel %vm678, %v387, 0
      %682 = vmatprep.subr.mxu0 0.0
      %683 = vmatpush1.msra.mxu0 0.0
      %684 = vmatprep.subr.mxu0 0.0
      %685 = vmatpush1.msra.mxu0 0.0
      %686 = vmatprep.subr.mxu0 0.0
      %687 = vmatpush1.msra.mxu0 0.0
      %688 = vmatprep.subr.mxu0 0.0
      %689 = vmatpush1.msra.mxu0 0.0
      %690 = vmatprep.subr.mxu0 0.0
      %691 = vmatpush1.msra.mxu0 0.0
      %692 = vmatprep.subr.mxu0 0.0
      %693 = vmatpush1.msra.mxu0 0.0
      %694 = vmatprep.subr.mxu0 0.0
      %695 = vmatpush1.msra.mxu0 0.0
      %696 = vmatprep.subr.mxu0 0.0
      %697 = vmatpush1.msra.mxu0 0.0
      %698 = vmatprep.subr.mxu0 0.0
      %699 = vmatpush1.msra.mxu0 0.0
      %700 = vmatprep.subr.mxu0 0.0
      %701 = vmatpush1.msra.mxu0 0.0
      %702 = vmatprep.subr.mxu0 0.0
      %703 = vmatpush1.msra.mxu0 0.0
      %704 = vmatprep.subr.mxu0 0.0
      %705 = vmatpush1.msra.mxu0 0.0
      %706 = vmatprep.subr.mxu0 0.0
      %707 = vmatpush1.msra.mxu0 0.0
      %708 = vmatprep.subr.mxu0 0.0
      %709 = vmatpush1.msra.mxu0 0.0
      %710 = vmatprep.subr.mxu0 0.0
      %711 = vmatpush1.msra.mxu0 %v56
      %712 = vmatprep.subr.mxu0 0.0
      %713 = vmatpush1.msra.mxu0 %v55
      %714 = vmatprep.subr.mxu0 0.0
      %715 = vmatpush2.msra.mxu0 0.0
      %716 = vmatprep.subr.mxu0 0.0
      %717 = vmatpush2.msra.mxu0 0.0
      %718 = vmatprep.subr.mxu0 0.0
      %719 = vmatpush2.msra.mxu0 0.0
      %720 = vmatprep.subr.mxu0 0.0
      %721 = vmatpush2.msra.mxu0 0.0
      %722 = vmatprep.subr.mxu0 0.0
      %723 = vmatpush2.msra.mxu0 0.0
      %724 = vmatprep.subr.mxu0 0.0
      %725 = vmatpush2.msra.mxu0 0.0
      %726 = vmatprep.subr.mxu0 0.0
      %727 = vmatpush2.msra.mxu0 0.0
      %728 = vmatprep.subr.mxu0 0.0
      %729 = vmatpush2.msra.mxu0 0.0
      %730 = vmatprep.subr.mxu0 0.0
      %731 = vmatpush2.msra.mxu0 0.0
      %732 = vmatprep.subr.mxu0 0.0
      %733 = vmatpush2.msra.mxu0 0.0
      %734 = vmatprep.subr.mxu0 0.0
      %735 = vmatpush2.msra.mxu0 0.0
      %736 = vmatprep.subr.mxu0 0.0
      %737 = vmatpush2.msra.mxu0 0.0
      %738 = vmatprep.subr.mxu0 0.0
      %739 = vmatpush2.msra.mxu0 0.0
      %740 = vmatprep.subr.mxu0 0.0
      %741 = vmatpush2.msra.mxu0 0.0
      %742 = vmatprep.subr.mxu0 0.0
      %743 = vmatpush2.msra.mxu0 0.0
      %744 = vmatprep.subr.mxu0 0.0
      %745 = vmatpush2.msra.mxu0 0.0
      %746 = vmatprep.mubr.f32.mxu0 0.0
      %747 = vmatmul.mubr.f32.gmra.mxu0 %v680
      %v748 = vpop.f32.mrf.mxu0
      %v749 = vadd.f32 %v675, %v748
      %v750 = vpop.f32.mrf.mxu0
      %751 = vdwg.mxu0
      %752 = vmatprep.subr.mxu0 0.0
      %753 = vmatpush1.msra.mxu0 0.0
      %754 = vmatprep.subr.mxu0 0.0
      %755 = vmatpush1.msra.mxu0 0.0
      %756 = vmatprep.subr.mxu0 0.0
      %757 = vmatpush1.msra.mxu0 0.0
      %758 = vmatprep.subr.mxu0 0.0
      %759 = vmatpush1.msra.mxu0 0.0
      %760 = vmatprep.subr.mxu0 0.0
      %761 = vmatpush1.msra.mxu0 0.0
      %762 = vmatprep.subr.mxu0 0.0
      %763 = vmatpush1.msra.mxu0 0.0
      %764 = vmatprep.subr.mxu0 0.0
      %765 = vmatpush1.msra.mxu0 0.0
      %766 = vmatprep.subr.mxu0 0.0
      %767 = vmatpush1.msra.mxu0 0.0
      %768 = vmatprep.subr.mxu0 0.0
      %769 = vmatpush1.msra.mxu0 0.0
      %770 = vmatprep.subr.mxu0 0.0
      %771 = vmatpush1.msra.mxu0 0.0
      %772 = vmatprep.subr.mxu0 0.0
      %773 = vmatpush1.msra.mxu0 0.0
      %774 = vmatprep.subr.mxu0 0.0
      %775 = vmatpush1.msra.mxu0 0.0
      %776 = vmatprep.subr.mxu0 0.0
      %777 = vmatpush1.msra.mxu0 %v64
      %778 = vmatprep.subr.mxu0 0.0
      %779 = vmatpush1.msra.mxu0 %v63
      %780 = vmatprep.subr.mxu0 0.0
      %781 = vmatpush1.msra.mxu0 %v62
      %782 = vmatprep.subr.mxu0 0.0
      %783 = vmatpush1.msra.mxu0 %v61
      %784 = vmatprep.subr.mxu0 0.0
      %785 = vmatpush2.msra.mxu0 0.0
      %786 = vmatprep.subr.mxu0 0.0
      %787 = vmatpush2.msra.mxu0 0.0
      %788 = vmatprep.subr.mxu0 0.0
      %789 = vmatpush2.msra.mxu0 0.0
      %790 = vmatprep.subr.mxu0 0.0
      %791 = vmatpush2.msra.mxu0 0.0
      %792 = vmatprep.subr.mxu0 0.0
      %793 = vmatpush2.msra.mxu0 0.0
      %794 = vmatprep.subr.mxu0 0.0
      %795 = vmatpush2.msra.mxu0 0.0
      %796 = vmatprep.subr.mxu0 0.0
      %797 = vmatpush2.msra.mxu0 0.0
      %798 = vmatprep.subr.mxu0 0.0
      %799 = vmatpush2.msra.mxu0 0.0
      %800 = vmatprep.subr.mxu0 0.0
      %801 = vmatpush2.msra.mxu0 0.0
      %802 = vmatprep.subr.mxu0 0.0
      %803 = vmatpush2.msra.mxu0 0.0
      %804 = vmatprep.subr.mxu0 0.0
      %805 = vmatpush2.msra.mxu0 0.0
      %806 = vmatprep.subr.mxu0 0.0
      %807 = vmatpush2.msra.mxu0 0.0
      %808 = vmatprep.subr.mxu0 0.0
      %809 = vmatpush2.msra.mxu0 0.0
      %810 = vmatprep.subr.mxu0 0.0
      %811 = vmatpush2.msra.mxu0 0.0
      %812 = vmatprep.subr.mxu0 0.0
      %813 = vmatpush2.msra.mxu0 0.0
      %814 = vmatprep.subr.mxu0 0.0
      %815 = vmatpush2.msra.mxu0 0.0
      %816 = vmatprep.mubr.f32.mxu0 0.0
      %817 = vmatmul.mubr.f32.gmra.mxu0 %v392
      %v818 = vpop.f32.mrf.mxu0
      %v819 = vadd.f32 0.0, %v818
      %v820 = vpop.f32.mrf.mxu0
      %821 = vdwg.mxu0
      %v822 = vadd.f32 %v749, %v819
      %v824 = vlaneseq
      %v825 = vshrl.u32 %v824, 7
      %v826 = vsub.s32 0, %v825
      %v827 = vrot.slane %v65, %v826
      %v829 = vadd.f32 %v822, %v827
      %v830 = vxor.u32 %v829, 2147483648
      %v831 = vmul.f32 %v830, 1.442695
      %v832 = vpow.pop %v831
      %v833 = vadd.f32 %v832, 1.0
      %v834 = vrcp.pop %v833
      %v835 = vmul.f32 1.0, %v834
      %v836 = vtanh.pop %v829
      %838 = vrot.lane.b32.xlu0 %v389, 32
      %v839 = vpop.permute.xlu0 %838
      %v841 = vmul.f32 %v835, %v839
      %843 = vrot.lane.b32.xlu0 %v836, 64
      %v844 = vpop.permute.xlu0 %843
      %v846 = vmul.f32 %v835, %v844
      %848 = vrot.lane.b32.xlu0 %v846, 32
      %v849 = vpop.permute.xlu0 %848
      %v851 = vadd.f32 %v841, %v849
      %v852 = vtanh.pop %v851
      %854 = vrot.lane.b32.xlu0 %v852, 64
      %v855 = vpop.permute.xlu0 %854
      %v857 = vmul.f32 %v835, %v855
      %859 = vrot.lane.b32.xlu0 %v857, 32
      %v860 = vpop.permute.xlu0 %859
      %862 = vst.msk [vmem:[#allocation2] sm:$0x3] %vm80, %v860
      %864 = vrot.lane.b32.xlu0 %v851, 96
      %v865 = vpop.permute.xlu0 %864
      %867 = vst.msk [vmem:[#allocation3] sm:$0x3] %vm80, %v865
      %v869 = vlaneseq
      %v870 = vshrl.u32 %v869, 7
      %v871 = vsub.s32 0, %v870
      %v872 = vrot.slane %v79, %v871
      %v874 = vsel %vm390, %v860, 0
      %876 = vmatprep.subr.mxu0 0.0
      %877 = vmatpush1.msra.mxu0 0.0
      %878 = vmatprep.subr.mxu0 0.0
      %879 = vmatpush1.msra.mxu0 0.0
      %880 = vmatprep.subr.mxu0 0.0
      %881 = vmatpush1.msra.mxu0 0.0
      %882 = vmatprep.subr.mxu0 0.0
      %883 = vmatpush1.msra.mxu0 0.0
      %884 = vmatprep.subr.mxu0 0.0
      %885 = vmatpush1.msra.mxu0 0.0
      %886 = vmatprep.subr.mxu0 0.0
      %887 = vmatpush1.msra.mxu0 0.0
      %888 = vmatprep.subr.mxu0 0.0
      %889 = vmatpush1.msra.mxu0 0.0
      %890 = vmatprep.subr.mxu0 0.0
      %891 = vmatpush1.msra.mxu0 0.0
      %892 = vmatprep.subr.mxu0 0.0
      %893 = vmatpush1.msra.mxu0 0.0
      %894 = vmatprep.subr.mxu0 0.0
      %895 = vmatpush1.msra.mxu0 0.0
      %896 = vmatprep.subr.mxu0 0.0
      %897 = vmatpush1.msra.mxu0 0.0
      %898 = vmatprep.subr.mxu0 0.0
      %899 = vmatpush1.msra.mxu0 0.0
      %900 = vmatprep.subr.mxu0 0.0
      %901 = vmatpush1.msra.mxu0 %v78
      %902 = vmatprep.subr.mxu0 0.0
      %903 = vmatpush1.msra.mxu0 %v77
      %904 = vmatprep.subr.mxu0 0.0
      %905 = vmatpush1.msra.mxu0 %v76
      %906 = vmatprep.subr.mxu0 0.0
      %907 = vmatpush1.msra.mxu0 %v75
      %908 = vmatprep.subr.mxu0 0.0
      %909 = vmatpush2.msra.mxu0 0.0
      %910 = vmatprep.subr.mxu0 0.0
      %911 = vmatpush2.msra.mxu0 0.0
      %912 = vmatprep.subr.mxu0 0.0
      %913 = vmatpush2.msra.mxu0 0.0
      %914 = vmatprep.subr.mxu0 0.0
      %915 = vmatpush2.msra.mxu0 0.0
      %916 = vmatprep.subr.mxu0 0.0
      %917 = vmatpush2.msra.mxu0 0.0
      %918 = vmatprep.subr.mxu0 0.0
      %919 = vmatpush2.msra.mxu0 0.0
      %920 = vmatprep.subr.mxu0 0.0
      %921 = vmatpush2.msra.mxu0 0.0
      %922 = vmatprep.subr.mxu0 0.0
      %923 = vmatpush2.msra.mxu0 0.0
      %924 = vmatprep.subr.mxu0 0.0
      %925 = vmatpush2.msra.mxu0 0.0
      %926 = vmatprep.subr.mxu0 0.0
      %927 = vmatpush2.msra.mxu0 0.0
      %928 = vmatprep.subr.mxu0 0.0
      %929 = vmatpush2.msra.mxu0 0.0
      %930 = vmatprep.subr.mxu0 0.0
      %931 = vmatpush2.msra.mxu0 0.0
      %932 = vmatprep.subr.mxu0 0.0
      %933 = vmatpush2.msra.mxu0 0.0
      %934 = vmatprep.subr.mxu0 0.0
      %935 = vmatpush2.msra.mxu0 0.0
      %936 = vmatprep.subr.mxu0 0.0
      %937 = vmatpush2.msra.mxu0 0.0
      %938 = vmatprep.subr.mxu0 0.0
      %939 = vmatpush2.msra.mxu0 0.0
      %940 = vmatprep.mubr.f32.mxu0 0.0
      %941 = vmatmul.mubr.f32.gmra.mxu0 %v874
      %v942 = vpop.f32.mrf.mxu0
      %v943 = vadd.f32 %v872, %v942
      %v944 = vpop.f32.mrf.mxu0
      %945 = vdwg.mxu0
      %s946 = scalar_lea.vmem [#allocation6], %s385
      %947 = vst.msk [vmem:[%s946] sm:$0x3] %vm80, %v943
    $region69: #{seq2seq_forward.1} parent=1 // loop_footer
      %s384 = sadd.s32 1, %s380
    $region70: #{seq2seq_forward.1} parent=1 // loop_footer_branch
      %379 = sbr.rel target = $region66
    $region71: #{seq2seq_forward.1} parent=1 // loop_exit
      _
    // Predicated region
    $region72: #{seq2seq_forward.1} parent=1 // pred_check
      _
    $region73: #{seq2seq_forward.1} parent=1 // pred_check_branch
      %949 = sbr.rel (0) target = $region75
    $region74: #{seq2seq_forward.1} parent=1 // pred_region
      %s951 = ssub.s32 160, 160
      %952 = vsyncadd [#allocation7], %s951
      %s953 = sshll.u32 [#allocation6], 4
      %s954 = int_to_ptr.vmem [resolvable:$true] %s953
      %959 = dma.vmem_to_hbm [thread:$0]  %s954, 160, %s14, [#allocation7], 32, 32, 2
    $region75: #{seq2seq_forward.1} parent=1 // pred_fallthru
      _
    // Predicated region
    $region76: #{seq2seq_forward.1} parent=1 // pred_check
      _
    $region77: #{seq2seq_forward.1} parent=1 // pred_check_branch
      %961 = sbr.rel (0) target = $region79
    $region78: #{seq2seq_forward.1} parent=1 // pred_region
      %962 = dma.done [#allocation7], 160
    $region79: #{seq2seq_forward.1} parent=1 // pred_fallthru
      _
    %963 = vsyncpa [#allocation7], 1

</llo_original>
